<compile_context>
chip_gen: v6e
topology: v6e:2x2x1
jax: 0.10.0
libtpu: 0.0.40
codegen_flags: <defaults>
</compile_context>

<pallas_src>
import math

import jax
import jax.numpy as jnp
from jax import lax
from jax.experimental import pallas as pl
from jax.experimental.pallas import tpu as pltpu


def _make_kernel(num_heads, seq_len, block_b, dq, dv, scale):
    """Builds the per-grid-step kernel. All sizes are static Python ints."""
    H, M, Bt, Dq, Dv = num_heads, seq_len, block_b, dq, dv

    def kernel(gamma_ref,                     # SMEM (1, 1) f32
               x_ref,                         # VMEM (Bt*M, C)
               wq_ref, bq_ref,                # VMEM (C, C//4), (1, C//4)
               wk_ref, bk_ref,                # VMEM (C, C//4), (1, C//4)
               wv_ref, bv_ref,                # VMEM (C, C),    (1, C)
               o_ref):                        # VMEM (Bt*M, C)
        x2 = x_ref[...]                                        # (Bt*M, C)

        # Fused full-width projections: one MXU matmul per Q/K/V for every
        # head and every batch row in this block. Scale folded into q.
        q = (jnp.dot(x2, wq_ref[...], preferred_element_type=jnp.float32)
             + bq_ref[...]) * scale                            # (Bt*M, H*Dq)
        k = (jnp.dot(x2, wk_ref[...], preferred_element_type=jnp.float32)
             + bk_ref[...])                                    # (Bt*M, H*Dq)
        v = (jnp.dot(x2, wv_ref[...], preferred_element_type=jnp.float32)
             + bv_ref[...])                                    # (Bt*M, H*Dv)

        # bf16 inputs -> feed bf16 into the MXU (f32 accumulate); f32 -> no-op.
        lowp = jnp.bfloat16 if x_ref.dtype == jnp.bfloat16 else jnp.float32
        gamma = gamma_ref[0, 0]

        # Static unroll over (batch rows in block) x (heads); Bt, H are small.
        for b in range(Bt):
            r0 = b * M
            for h in range(H):
                qh = q[r0:r0 + M, h * Dq:(h + 1) * Dq].astype(lowp)   # (M, Dq)
                kh = k[r0:r0 + M, h * Dq:(h + 1) * Dq].astype(lowp)   # (M, Dq)
                vh = v[r0:r0 + M, h * Dv:(h + 1) * Dv].astype(lowp)   # (M, Dv)

                # q @ k^T without materializing a transpose (contract last dims).
                s = lax.dot_general(qh, kh, (((1,), (1,)), ((), ())),
                                    preferred_element_type=jnp.float32)  # (M, M)

                # Softmax in f32. act='none', att_drop p=0.0, mask=None.
                m = jnp.max(s, axis=-1, keepdims=True)
                e = jnp.exp(s - m)
                denom = jnp.sum(e, axis=-1, keepdims=True)
                beta = e * pl.reciprocal(denom, approx=True)     # EUP vrcp slot

                pv = jnp.dot(beta.astype(lowp), vh,
                             preferred_element_type=jnp.float32)  # (M, Dv)

                # Head h written directly at lane offset h*Dv -> output already
                # in (B, M, C) layout, no post-kernel transpose.
                o_ref[r0:r0 + M, h * Dv:(h + 1) * Dv] = (
                    gamma * pv).astype(o_ref.dtype)

    return kernel


def transformer_forward(x, params, num_heads=1, block_b=None, interpret=False):
    """x: (B, M, C). Returns (B, M, C), same dtype as x."""
    B, M, C = x.shape
    H = num_heads
    assert C % (H * 4) == 0
    Dq = C // (4 * H)
    Dv = C // H
    scale = 1.0 / math.sqrt(Dq)

    wq, bq, wk, bk, wv, bv, gamma = params
    dt = x.dtype
    # PyTorch Linear weights are (out, in); pre-transpose once for x @ W.
    wq_t = wq.T.astype(dt)                      # (C, C//4)
    wk_t = wk.T.astype(dt)                      # (C, C//4)
    wv_t = wv.T.astype(dt)                      # (C, C)
    bq2 = bq.reshape(1, -1).astype(jnp.float32)
    bk2 = bk.reshape(1, -1).astype(jnp.float32)
    bv2 = bv.reshape(1, -1).astype(jnp.float32)
    gamma2 = jnp.asarray(gamma, jnp.float32).reshape(1, 1)

    # Choose how many batch rows to coalesce per grid step.
    if block_b is None:
        if M % 8 == 0:
            block_b = 1
            for cand in range(B, 0, -1):
                if B % cand == 0 and cand * M <= 256:
                    block_b = cand
                    break
        else:
            # Block rows must be a multiple of 8 or the full extent.
            block_b = B
    assert B % block_b == 0
    R = block_b * M                              # rows per grid step

    # Flatten (B, M, C) -> (B*M, C): contiguous, metadata-only reshape.
    x_flat = x.reshape(B * M, C)

    kernel = _make_kernel(H, M, block_b, Dq, Dv, scale)

    # Explicit VMEM budget (don't rely on the per-chip scoped default).
    est = 4 * (wq_t.size + wk_t.size + wv_t.size
               + bq2.size + bk2.size + bv2.size      # resident weights/biases
               + 4 * R * C                            # x + out, double-buffered
               + R * (C // 2 + C)                     # q, k, v intermediates (f32)
               + 4 * M * M + M * Dv)                  # scores / exp / beta / pv
    vmem_limit = int(min(100 * 1024 * 1024, max(32 * 1024 * 1024, 2 * est)))

    out_flat = pl.pallas_call(
        kernel,
        out_shape=jax.ShapeDtypeStruct((B * M, C), x.dtype),
        grid_spec=pltpu.PrefetchScalarGridSpec(
            num_scalar_prefetch=0,
            grid=(B // block_b,),
            in_specs=[
                # gamma scalar in SMEM (whole array, untiled)
                pl.BlockSpec(memory_space=pltpu.MemorySpace.SMEM),
                # x row-block
                pl.BlockSpec((R, C), lambda i: (i, 0)),
                # full weights / biases, constant block index -> resident
                pl.BlockSpec((C, C // 4), lambda i: (0, 0)),
                pl.BlockSpec((1, C // 4), lambda i: (0, 0)),
                pl.BlockSpec((C, C // 4), lambda i: (0, 0)),
                pl.BlockSpec((1, C // 4), lambda i: (0, 0)),
                pl.BlockSpec((C, C), lambda i: (0, 0)),
                pl.BlockSpec((1, C), lambda i: (0, 0)),
            ],
            out_specs=pl.BlockSpec((R, C), lambda i: (i, 0)),
        ),
        compiler_params=pltpu.CompilerParams(
            dimension_semantics=("parallel",),
            vmem_limit_bytes=vmem_limit),
        interpret=interpret,
    )(gamma2, x_flat, wq_t, bq2, wk_t, bk2, wv_t, bv2)

    return out_flat.reshape(B, M, C)


def reference_forward(x, params, num_heads=1):
    """Pure-JAX reference mirroring the PyTorch forward exactly."""
    B, M, C = x.shape
    H = num_heads
    wq, bq, wk, bk, wv, bv, gamma = params
    q = x @ wq.T + bq                                   # (B, M, C//4)
    k = x @ wk.T + bk                                   # (B, M, C//4)
    v = x @ wv.T + bv                                   # (B, M, C)
    f = q.reshape(B, M, H, -1).transpose(0, 2, 1, 3)    # (B, H, M, Dq)
    g = k.reshape(B, M, H, -1).transpose(0, 2, 3, 1)    # (B, H, Dq, M)
    h = v.reshape(B, M, H, -1).transpose(0, 2, 1, 3)    # (B, H, M, Dv)
    s = jnp.einsum("bhmd,bhdn->bhmn", f, g) / math.sqrt(f.shape[-1])
    beta = jax.nn.softmax(s, axis=-1)
    o = gamma.reshape(()) * jnp.einsum("bhmn,bhnd->bhmd", beta, h)
    return o.transpose(0, 2, 1, 3).reshape(B, M, C)


def init_params(key, n_channels):
    """Deterministic parameter init matching the module's shapes.
    query/key: Linear(C, C//4); value: Linear(C, C); gamma: scalar.
    (gamma is set to 0.5 instead of the module's 0.0 so the kernel output is
    non-trivially exercised; semantics are identical for any gamma value.)"""
    C = n_channels
    ks = jax.random.split(key, 3)
    gain = math.sqrt(2.0)  # calculate_gain('relu')

    def xavier(k, shape):
        fan_out, fan_in = shape
        std = gain * math.sqrt(2.0 / float(fan_in + fan_out))
        a = math.sqrt(3.0) * std
        return jax.random.uniform(k, shape, jnp.float32, minval=-a, maxval=a)

    wq = xavier(ks[0], (C // 4, C))
    wk = xavier(ks[1], (C // 4, C))
    wv = xavier(ks[2], (C, C))
    bq = jnp.zeros((C // 4,), jnp.float32)
    bk = jnp.zeros((C // 4,), jnp.float32)
    bv = jnp.zeros((C,), jnp.float32)
    gamma = jnp.array([0.5], jnp.float32)
    return (wq, bq, wk, bk, wv, bv, gamma)


if __name__ == "__main__":
    B, M, C, H = 2, 8, 32, 1   # C % (H*4) == 0
    key = jax.random.PRNGKey(0)
    kx, kp = jax.random.split(key)
    x = jax.random.normal(kx, (B, M, C), jnp.float32)
    params = init_params(kp, C)

    out = transformer_forward(x, params, num_heads=H)
    out = jax.block_until_ready(out)

    ref = reference_forward(x, params, num_heads=H)
    assert out.shape == (B, M, C)
    # Tolerance accounts for the approximate EUP reciprocal in the softmax
    # denominator (~1e-4 relative); still a meaningful check on O(1) outputs.
    max_diff = jnp.max(jnp.abs(out - ref))
    assert jnp.allclose(out, ref, atol=1e-2, rtol=1e-2), (
        f"max abs diff {max_diff}")
    print("KERNEL_OK")
</pallas_src>

<mosaic_0001>
module attributes {stable_mosaic.version = 11 : i64} {
  func.func @kernel(%arg0: i32, %arg1: memref<1x1xf32, #tpu.memory_space<smem>>, %arg2: memref<16x32xf32, #tpu.memory_space<vmem>>, %arg3: memref<32x8xf32, #tpu.memory_space<vmem>>, %arg4: memref<1x8xf32, #tpu.memory_space<vmem>>, %arg5: memref<32x8xf32, #tpu.memory_space<vmem>>, %arg6: memref<1x8xf32, #tpu.memory_space<vmem>>, %arg7: memref<32x32xf32, #tpu.memory_space<vmem>>, %arg8: memref<1x32xf32, #tpu.memory_space<vmem>>, %arg9: memref<16x32xf32, #tpu.memory_space<vmem>>) attributes {dimension_semantics = [#tpu.dimension_semantics<parallel>], iteration_bounds = array<i64: 1>, scalar_prefetch = 0 : i64, scratch_operands = 0 : i64, tpu.core_type = #tpu.core_type<tc>, window_params = [{transform_indices = @transform_0, window_bounds = array<i64: 1, 1>}, {transform_indices = @transform_1, window_bounds = array<i64: 16, 32>}, {pipeline_mode = #tpu.pipeline_mode<synchronous>, transform_indices = @transform_2, window_bounds = array<i64: 32, 8>}, {pipeline_mode = #tpu.pipeline_mode<synchronous>, transform_indices = @transform_3, window_bounds = array<i64: 1, 8>}, {pipeline_mode = #tpu.pipeline_mode<synchronous>, transform_indices = @transform_4, window_bounds = array<i64: 32, 8>}, {pipeline_mode = #tpu.pipeline_mode<synchronous>, transform_indices = @transform_5, window_bounds = array<i64: 1, 8>}, {pipeline_mode = #tpu.pipeline_mode<synchronous>, transform_indices = @transform_6, window_bounds = array<i64: 32, 32>}, {pipeline_mode = #tpu.pipeline_mode<synchronous>, transform_indices = @transform_7, window_bounds = array<i64: 1, 32>}, {transform_indices = @transform_8, window_bounds = array<i64: 16, 32>}]} {
    %c0 = arith.constant 0 : index
    %c0_0 = arith.constant 0 : index
    %0 = vector.load %arg2[%c0, %c0_0] : memref<16x32xf32, #tpu.memory_space<vmem>>, vector<16x32xf32>
    %c0_1 = arith.constant 0 : index
    %c0_2 = arith.constant 0 : index
    %1 = vector.load %arg3[%c0_1, %c0_2] : memref<32x8xf32, #tpu.memory_space<vmem>>, vector<32x8xf32>
    %cst = arith.constant dense<0.000000e+00> : vector<16x8xf32>
    %2 = tpu.matmul %0, %1, %cst {dimension_numbers = #tpu.dot_dimension_numbers<[1], [0], [0], [1], [0, 0, 1, 1], [], []>} : vector<16x32xf32>, vector<32x8xf32>, vector<16x8xf32> -> vector<16x8xf32>
    %c0_3 = arith.constant 0 : index
    %c0_4 = arith.constant 0 : index
    %3 = vector.load %arg4[%c0_3, %c0_4] : memref<1x8xf32, #tpu.memory_space<vmem>>, vector<1x8xf32>
    %4 = vector.broadcast %3 : vector<1x8xf32> to vector<16x8xf32>
    %5 = arith.addf %2, %4 : vector<16x8xf32>
    %cst_5 = arith.constant 0.353553385 : f32
    %6 = vector.broadcast %cst_5 : f32 to vector<16x8xf32>
    %7 = arith.mulf %5, %6 : vector<16x8xf32>
    %c0_6 = arith.constant 0 : index
    %c0_7 = arith.constant 0 : index
    %8 = vector.load %arg5[%c0_6, %c0_7] : memref<32x8xf32, #tpu.memory_space<vmem>>, vector<32x8xf32>
    %cst_8 = arith.constant dense<0.000000e+00> : vector<16x8xf32>
    %9 = tpu.matmul %0, %8, %cst_8 {dimension_numbers = #tpu.dot_dimension_numbers<[1], [0], [0], [1], [0, 0, 1, 1], [], []>} : vector<16x32xf32>, vector<32x8xf32>, vector<16x8xf32> -> vector<16x8xf32>
    %c0_9 = arith.constant 0 : index
    %c0_10 = arith.constant 0 : index
    %10 = vector.load %arg6[%c0_9, %c0_10] : memref<1x8xf32, #tpu.memory_space<vmem>>, vector<1x8xf32>
    %11 = vector.broadcast %10 : vector<1x8xf32> to vector<16x8xf32>
    %12 = arith.addf %9, %11 : vector<16x8xf32>
    %c0_11 = arith.constant 0 : index
    %c0_12 = arith.constant 0 : index
    %13 = vector.load %arg7[%c0_11, %c0_12] : memref<32x32xf32, #tpu.memory_space<vmem>>, vector<32x32xf32>
    %cst_13 = arith.constant dense<0.000000e+00> : vector<16x32xf32>
    %14 = tpu.matmul %0, %13, %cst_13 {dimension_numbers = #tpu.dot_dimension_numbers<[1], [0], [0], [1], [0, 0, 1, 1], [], []>} : vector<16x32xf32>, vector<32x32xf32>, vector<16x32xf32> -> vector<16x32xf32>
    %c0_14 = arith.constant 0 : index
    %c0_15 = arith.constant 0 : index
    %15 = vector.load %arg8[%c0_14, %c0_15] : memref<1x32xf32, #tpu.memory_space<vmem>>, vector<1x32xf32>
    %16 = vector.broadcast %15 : vector<1x32xf32> to vector<16x32xf32>
    %17 = arith.addf %14, %16 : vector<16x32xf32>
    %c0_16 = arith.constant 0 : index
    %c0_17 = arith.constant 0 : index
    %18 = memref.load %arg1[%c0_16, %c0_17] : memref<1x1xf32, #tpu.memory_space<smem>>
    %19 = vector.extract_strided_slice %7 {offsets = [0, 0], sizes = [8, 8], strides = [1, 1]} : vector<16x8xf32> to vector<8x8xf32>
    %20 = vector.extract_strided_slice %12 {offsets = [0, 0], sizes = [8, 8], strides = [1, 1]} : vector<16x8xf32> to vector<8x8xf32>
    %21 = vector.extract_strided_slice %17 {offsets = [0, 0], sizes = [8, 32], strides = [1, 1]} : vector<16x32xf32> to vector<8x32xf32>
    %cst_18 = arith.constant dense<0.000000e+00> : vector<8x8xf32>
    %22 = tpu.matmul %19, %20, %cst_18 {dimension_numbers = #tpu.dot_dimension_numbers<[1], [1], [0], [0], [0, 0, 1, 0], [], []>} : vector<8x8xf32>, vector<8x8xf32>, vector<8x8xf32> -> vector<8x8xf32>
    %cst_19 = arith.constant dense<0xFF800000> : vector<8xf32>
    %23 = vector.multi_reduction <maximumf>, %22, %cst_19 [1] : vector<8x8xf32> to vector<8xf32>
    %24 = vector.shape_cast %23 : vector<8xf32> to vector<8x1xf32>
    %25 = vector.broadcast %24 : vector<8x1xf32> to vector<8x8xf32>
    %26 = arith.subf %22, %25 : vector<8x8xf32>
    %27 = math.exp %26 : vector<8x8xf32>
    %cst_20 = arith.constant dense<0.000000e+00> : vector<8xf32>
    %28 = vector.multi_reduction <add>, %27, %cst_20 [1] : vector<8x8xf32> to vector<8xf32>
    %29 = vector.shape_cast %28 : vector<8xf32> to vector<8x1xf32>
    %30 = tpu.reciprocal %29 {approx = true} : vector<8x1xf32> -> vector<8x1xf32>
    %31 = vector.broadcast %30 : vector<8x1xf32> to vector<8x8xf32>
    %32 = arith.mulf %27, %31 : vector<8x8xf32>
    %cst_21 = arith.constant dense<0.000000e+00> : vector<8x32xf32>
    %33 = tpu.matmul %32, %21, %cst_21 {dimension_numbers = #tpu.dot_dimension_numbers<[1], [0], [0], [1], [0, 0, 1, 1], [], []>} : vector<8x8xf32>, vector<8x32xf32>, vector<8x32xf32> -> vector<8x32xf32>
    %34 = vector.broadcast %18 : f32 to vector<8x32xf32>
    %35 = arith.mulf %34, %33 : vector<8x32xf32>
    %c0_22 = arith.constant 0 : index
    %c0_23 = arith.constant 0 : index
    %36 = vector.load %arg9[%c0_22, %c0_23] : memref<16x32xf32, #tpu.memory_space<vmem>>, vector<8x32xf32>
    tpu.vector_store %arg9[%c0_22, %c0_23], %35 {strides = array<i32>} : memref<16x32xf32, #tpu.memory_space<vmem>>, vector<8x32xf32>,
    %37 = vector.extract_strided_slice %7 {offsets = [8, 0], sizes = [8, 8], strides = [1, 1]} : vector<16x8xf32> to vector<8x8xf32>
    %38 = vector.extract_strided_slice %12 {offsets = [8, 0], sizes = [8, 8], strides = [1, 1]} : vector<16x8xf32> to vector<8x8xf32>
    %39 = vector.extract_strided_slice %17 {offsets = [8, 0], sizes = [8, 32], strides = [1, 1]} : vector<16x32xf32> to vector<8x32xf32>
    %cst_24 = arith.constant dense<0.000000e+00> : vector<8x8xf32>
    %40 = tpu.matmul %37, %38, %cst_24 {dimension_numbers = #tpu.dot_dimension_numbers<[1], [1], [0], [0], [0, 0, 1, 0], [], []>} : vector<8x8xf32>, vector<8x8xf32>, vector<8x8xf32> -> vector<8x8xf32>
    %cst_25 = arith.constant dense<0xFF800000> : vector<8xf32>
    %41 = vector.multi_reduction <maximumf>, %40, %cst_25 [1] : vector<8x8xf32> to vector<8xf32>
    %42 = vector.shape_cast %41 : vector<8xf32> to vector<8x1xf32>
    %43 = vector.broadcast %42 : vector<8x1xf32> to vector<8x8xf32>
    %44 = arith.subf %40, %43 : vector<8x8xf32>
    %45 = math.exp %44 : vector<8x8xf32>
    %cst_26 = arith.constant dense<0.000000e+00> : vector<8xf32>
    %46 = vector.multi_reduction <add>, %45, %cst_26 [1] : vector<8x8xf32> to vector<8xf32>
    %47 = vector.shape_cast %46 : vector<8xf32> to vector<8x1xf32>
    %48 = tpu.reciprocal %47 {approx = true} : vector<8x1xf32> -> vector<8x1xf32>
    %49 = vector.broadcast %48 : vector<8x1xf32> to vector<8x8xf32>
    %50 = arith.mulf %45, %49 : vector<8x8xf32>
    %cst_27 = arith.constant dense<0.000000e+00> : vector<8x32xf32>
    %51 = tpu.matmul %50, %39, %cst_27 {dimension_numbers = #tpu.dot_dimension_numbers<[1], [0], [0], [1], [0, 0, 1, 1], [], []>} : vector<8x8xf32>, vector<8x32xf32>, vector<8x32xf32> -> vector<8x32xf32>
    %52 = vector.broadcast %18 : f32 to vector<8x32xf32>
    %53 = arith.mulf %52, %51 : vector<8x32xf32>
    %c8 = arith.constant 8 : index
    %c0_28 = arith.constant 0 : index
    %54 = vector.load %arg9[%c8, %c0_28] : memref<16x32xf32, #tpu.memory_space<vmem>>, vector<8x32xf32>
    tpu.vector_store %arg9[%c8, %c0_28], %53 {strides = array<i32>} : memref<16x32xf32, #tpu.memory_space<vmem>>, vector<8x32xf32>,
    return
  }
  func.func @transform_0(%arg0: i32) -> (i32, i32) {
    %c0_i32 = arith.constant 0 : i32
    %c0_i32_0 = arith.constant 0 : i32
    %c0_i32_1 = arith.constant 0 : i32
    return %c0_i32, %c0_i32_0 : i32, i32
  }
  func.func @transform_1(%arg0: i32) -> (i32, i32) {
    %c0_i32 = arith.constant 0 : i32
    %c0_i32_0 = arith.constant 0 : i32
    return %arg0, %c0_i32 : i32, i32
  }
  func.func @transform_2(%arg0: i32) -> (i32, i32) {
    %c0_i32 = arith.constant 0 : i32
    %c0_i32_0 = arith.constant 0 : i32
    %c0_i32_1 = arith.constant 0 : i32
    return %c0_i32, %c0_i32_0 : i32, i32
  }
  func.func @transform_3(%arg0: i32) -> (i32, i32) {
    %c0_i32 = arith.constant 0 : i32
    %c0_i32_0 = arith.constant 0 : i32
    %c0_i32_1 = arith.constant 0 : i32
    return %c0_i32, %c0_i32_0 : i32, i32
  }
  func.func @transform_4(%arg0: i32) -> (i32, i32) {
    %c0_i32 = arith.constant 0 : i32
    %c0_i32_0 = arith.constant 0 : i32
    %c0_i32_1 = arith.constant 0 : i32
    return %c0_i32, %c0_i32_0 : i32, i32
  }
  func.func @transform_5(%arg0: i32) -> (i32, i32) {
    %c0_i32 = arith.constant 0 : i32
    %c0_i32_0 = arith.constant 0 : i32
    %c0_i32_1 = arith.constant 0 : i32
    return %c0_i32, %c0_i32_0 : i32, i32
  }
  func.func @transform_6(%arg0: i32) -> (i32, i32) {
    %c0_i32 = arith.constant 0 : i32
    %c0_i32_0 = arith.constant 0 : i32
    %c0_i32_1 = arith.constant 0 : i32
    return %c0_i32, %c0_i32_0 : i32, i32
  }
  func.func @transform_7(%arg0: i32) -> (i32, i32) {
    %c0_i32 = arith.constant 0 : i32
    %c0_i32_0 = arith.constant 0 : i32
    %c0_i32_1 = arith.constant 0 : i32
    return %c0_i32, %c0_i32_0 : i32, i32
  }
  func.func @transform_8(%arg0: i32) -> (i32, i32) {
    %c0_i32 = arith.constant 0 : i32
    %c0_i32_0 = arith.constant 0 : i32
    return %arg0, %c0_i32 : i32, i32
  }
}

</mosaic_0001>

<llo_original>
// kernel: tpu_custom_call.1
$region0: #{tpu_custom_call.1}
  #allocation0 [shape = 'u32[]', space=smem, size = 0x4, offset = 0x4, fixed_abs, tag = 'smem constant byte address 0x4 - core index']
  #allocation1 [shape = 'u32[144,128]{1,0:T(1,128)}', space=vmem, size = 0x12000, scoped, tag = 'internal scratch']
  #allocation2 [shape = 'f32[1,1]{1,0:T(1,128)S(6)}', space=smem, size = 0x200, scoped, tag = 'scoped memory for tpu_custom_call.1']
  %s0 = inlined_call_operand.<no memory space> [shape: f32[1,1], index: 0, kind: input, shape index: {}]
  %s1 = inlined_call_operand.vmem [shape: f32[16,32], index: 1, kind: input, shape index: {}]
  %s2 = inlined_call_operand.vmem [shape: f32[32,8], index: 2, kind: input, shape index: {}]
  %s3 = inlined_call_operand.vmem [shape: f32[1,8], index: 3, kind: input, shape index: {}]
  %s4 = inlined_call_operand.vmem [shape: f32[32,8], index: 4, kind: input, shape index: {}]
  %s5 = inlined_call_operand.vmem [shape: f32[1,8], index: 5, kind: input, shape index: {}]
  %s6 = inlined_call_operand.vmem [shape: f32[32,32], index: 6, kind: input, shape index: {}]
  %s7 = inlined_call_operand.vmem [shape: f32[1,32], index: 7, kind: input, shape index: {}]
  %s8 = inlined_call_operand.hbm [shape: f32[16,32], index: 8, kind: output, shape index: {}]
  %s9 = sld [smem:[#allocation0]]
  $region42: #{tpu_custom_call.1} parent=0
    _
  %s11 = ssub.s32 1, %s9
  %s12 = scalar_select 0, %s11, %s9
  %13 = sst [smem:[#allocation2]] %s0
  $region1: #{tpu_custom_call.1} parent=0
    #allocation3 [shape = 'u8[8192]{0}', space=vmem, size = 0x2000, scoped, tag = 'output window, operand 0, single buffered']
    #allocation4 [shape = 's32[1]{0}', space=sflag, size = 0x4, scoped, tag = 'scoped memory for tpu_custom_call.1']
    %14 = vsyncpa [#allocation4], 0
    // Predicated region
    $region2: #{tpu_custom_call.1} parent=1 // pred_check
      _
    $region3: #{tpu_custom_call.1} parent=1 // pred_check_branch
      %16 = sbr.rel (0) target = $region5
    $region4: #{tpu_custom_call.1} parent=1 // pred_region
      _
    $region5: #{tpu_custom_call.1} parent=1 // pred_fallthru
      _
    // Predicated region
    $region6: #{tpu_custom_call.1} parent=1 // pred_check
      _
    $region7: #{tpu_custom_call.1} parent=1 // pred_check_branch
      %18 = sbr.rel (0) target = $region9
    $region8: #{tpu_custom_call.1} parent=1 // pred_region
      _
    $region9: #{tpu_custom_call.1} parent=1 // pred_fallthru
      _
    // Predicated region
    $region10: #{tpu_custom_call.1} parent=1 // pred_check
      _
    $region11: #{tpu_custom_call.1} parent=1 // pred_check_branch
      %20 = sbr.rel (0) target = $region13
    $region12: #{tpu_custom_call.1} parent=1 // pred_region
      _
    $region13: #{tpu_custom_call.1} parent=1 // pred_fallthru
      _
    // Predicated region
    $region14: #{tpu_custom_call.1} parent=1 // pred_check
      _
    $region15: #{tpu_custom_call.1} parent=1 // pred_check_branch
      %22 = sbr.rel (0) target = $region17
    $region16: #{tpu_custom_call.1} parent=1 // pred_region
      _
    $region17: #{tpu_custom_call.1} parent=1 // pred_fallthru
      _
    // Predicated region
    $region18: #{tpu_custom_call.1} parent=1 // pred_check
      _
    $region19: #{tpu_custom_call.1} parent=1 // pred_check_branch
      %24 = sbr.rel (0) target = $region21
    $region20: #{tpu_custom_call.1} parent=1 // pred_region
      _
    $region21: #{tpu_custom_call.1} parent=1 // pred_fallthru
      _
    // Predicated region
    $region22: #{tpu_custom_call.1} parent=1 // pred_check
      _
    $region23: #{tpu_custom_call.1} parent=1 // pred_check_branch
      %26 = sbr.rel (0) target = $region25
    $region24: #{tpu_custom_call.1} parent=1 // pred_region
      _
    $region25: #{tpu_custom_call.1} parent=1 // pred_fallthru
      _
    // Predicated region
    $region26: #{tpu_custom_call.1} parent=1 // pred_check
      _
    $region27: #{tpu_custom_call.1} parent=1 // pred_check_branch
      %28 = sbr.rel (0) target = $region29
    $region28: #{tpu_custom_call.1} parent=1 // pred_region
      _
    $region29: #{tpu_custom_call.1} parent=1 // pred_fallthru
      _
    // Predicated region
    $region30: #{tpu_custom_call.1} parent=1 // pred_check
      _
    $region31: #{tpu_custom_call.1} parent=1 // pred_check_branch
      %30 = sbr.rel (0) target = $region33
    $region32: #{tpu_custom_call.1} parent=1 // pred_region
      _
    $region33: #{tpu_custom_call.1} parent=1 // pred_fallthru
      _
    %v31 = vld [vmem:[%s1] sm:$0xff]
    %v32 = vld [vmem:[%s1 + $0x8] sm:$0xff]
    %v33 = vld [vmem:[%s2] sm:$0xff]
    %v34 = vld [vmem:[%s2 + $0x8] sm:$0xff]
    %v35 = vld [vmem:[%s2 + $0x10] sm:$0xff]
    %v36 = vld [vmem:[%s2 + $0x18] sm:$0xff]
    %v37 = vld [vmem:[%s3] sm:$0x1]
    %v39 = vlaneseq
    %v40 = vshrl.u32 %v39, 7
    %v41 = vsub.s32 0, %v40
    %v42 = vrot.slane %v37, %v41
    %vm44 = vcmask 261120
    %v46 = vsel %vm44, %v31, 0
    %v49 = vsel %vm44, %v32, 0
    %51 = vmatprep.subr.mxu0 0.0
    %52 = vmatpush1.msra.mxu0 0.0
    %53 = vmatprep.subr.mxu0 0.0
    %54 = vmatpush1.msra.mxu0 0.0
    %55 = vmatprep.subr.mxu0 0.0
    %56 = vmatpush1.msra.mxu0 0.0
    %57 = vmatprep.subr.mxu0 0.0
    %58 = vmatpush1.msra.mxu0 0.0
    %59 = vmatprep.subr.mxu0 0.0
    %60 = vmatpush1.msra.mxu0 0.0
    %61 = vmatprep.subr.mxu0 0.0
    %62 = vmatpush1.msra.mxu0 0.0
    %63 = vmatprep.subr.mxu0 0.0
    %64 = vmatpush1.msra.mxu0 0.0
    %65 = vmatprep.subr.mxu0 0.0
    %66 = vmatpush1.msra.mxu0 0.0
    %67 = vmatprep.subr.mxu0 0.0
    %68 = vmatpush1.msra.mxu0 0.0
    %69 = vmatprep.subr.mxu0 0.0
    %70 = vmatpush1.msra.mxu0 0.0
    %71 = vmatprep.subr.mxu0 0.0
    %72 = vmatpush1.msra.mxu0 0.0
    %73 = vmatprep.subr.mxu0 0.0
    %74 = vmatpush1.msra.mxu0 0.0
    %75 = vmatprep.subr.mxu0 0.0
    %76 = vmatpush1.msra.mxu0 %v36
    %77 = vmatprep.subr.mxu0 0.0
    %78 = vmatpush1.msra.mxu0 %v35
    %79 = vmatprep.subr.mxu0 0.0
    %80 = vmatpush1.msra.mxu0 %v34
    %81 = vmatprep.subr.mxu0 0.0
    %82 = vmatpush1.msra.mxu0 %v33
    %83 = vmatprep.subr.mxu0 0.0
    %84 = vmatpush2.msra.mxu0 0.0
    %85 = vmatprep.subr.mxu0 0.0
    %86 = vmatpush2.msra.mxu0 0.0
    %87 = vmatprep.subr.mxu0 0.0
    %88 = vmatpush2.msra.mxu0 0.0
    %89 = vmatprep.subr.mxu0 0.0
    %90 = vmatpush2.msra.mxu0 0.0
    %91 = vmatprep.subr.mxu0 0.0
    %92 = vmatpush2.msra.mxu0 0.0
    %93 = vmatprep.subr.mxu0 0.0
    %94 = vmatpush2.msra.mxu0 0.0
    %95 = vmatprep.subr.mxu0 0.0
    %96 = vmatpush2.msra.mxu0 0.0
    %97 = vmatprep.subr.mxu0 0.0
    %98 = vmatpush2.msra.mxu0 0.0
    %99 = vmatprep.subr.mxu0 0.0
    %100 = vmatpush2.msra.mxu0 0.0
    %101 = vmatprep.subr.mxu0 0.0
    %102 = vmatpush2.msra.mxu0 0.0
    %103 = vmatprep.subr.mxu0 0.0
    %104 = vmatpush2.msra.mxu0 0.0
    %105 = vmatprep.subr.mxu0 0.0
    %106 = vmatpush2.msra.mxu0 0.0
    %107 = vmatprep.subr.mxu0 0.0
    %108 = vmatpush2.msra.mxu0 0.0
    %109 = vmatprep.subr.mxu0 0.0
    %110 = vmatpush2.msra.mxu0 0.0
    %111 = vmatprep.subr.mxu0 0.0
    %112 = vmatpush2.msra.mxu0 0.0
    %113 = vmatprep.subr.mxu0 0.0
    %114 = vmatpush2.msra.mxu0 0.0
    %115 = vmatprep.mubr.f32.mxu0 0.0
    %116 = vmatmul.mubr.f32.gmra.mxu0 %v46
    %v117 = vpop.f32.mrf.mxu0
    %v118 = vadd.f32 %v42, %v117
    %v119 = vpop.f32.mrf.mxu0
    %120 = vmatprep.mubr.f32.mxu0 0.0
    %121 = vmatmul.mubr.f32.gmra.mxu0 %v49
    %v122 = vpop.f32.mrf.mxu0
    %v123 = vadd.f32 %v42, %v122
    %v124 = vpop.f32.mrf.mxu0
    %125 = vdwg.mxu0
    %v126 = vmul.f32 %v118, 0.35355338
    %v127 = vmul.f32 %v123, 0.35355338
    %v128 = vld [vmem:[%s4] sm:$0xff]
    %v129 = vld [vmem:[%s4 + $0x8] sm:$0xff]
    %v130 = vld [vmem:[%s4 + $0x10] sm:$0xff]
    %v131 = vld [vmem:[%s4 + $0x18] sm:$0xff]
    %v132 = vld [vmem:[%s5] sm:$0x1]
    %v134 = vlaneseq
    %v135 = vshrl.u32 %v134, 7
    %v136 = vsub.s32 0, %v135
    %v137 = vrot.slane %v132, %v136
    %139 = vmatprep.subr.mxu0 0.0
    %140 = vmatpush1.msra.mxu0 0.0
    %141 = vmatprep.subr.mxu0 0.0
    %142 = vmatpush1.msra.mxu0 0.0
    %143 = vmatprep.subr.mxu0 0.0
    %144 = vmatpush1.msra.mxu0 0.0
    %145 = vmatprep.subr.mxu0 0.0
    %146 = vmatpush1.msra.mxu0 0.0
    %147 = vmatprep.subr.mxu0 0.0
    %148 = vmatpush1.msra.mxu0 0.0
    %149 = vmatprep.subr.mxu0 0.0
    %150 = vmatpush1.msra.mxu0 0.0
    %151 = vmatprep.subr.mxu0 0.0
    %152 = vmatpush1.msra.mxu0 0.0
    %153 = vmatprep.subr.mxu0 0.0
    %154 = vmatpush1.msra.mxu0 0.0
    %155 = vmatprep.subr.mxu0 0.0
    %156 = vmatpush1.msra.mxu0 0.0
    %157 = vmatprep.subr.mxu0 0.0
    %158 = vmatpush1.msra.mxu0 0.0
    %159 = vmatprep.subr.mxu0 0.0
    %160 = vmatpush1.msra.mxu0 0.0
    %161 = vmatprep.subr.mxu0 0.0
    %162 = vmatpush1.msra.mxu0 0.0
    %163 = vmatprep.subr.mxu0 0.0
    %164 = vmatpush1.msra.mxu0 %v131
    %165 = vmatprep.subr.mxu0 0.0
    %166 = vmatpush1.msra.mxu0 %v130
    %167 = vmatprep.subr.mxu0 0.0
    %168 = vmatpush1.msra.mxu0 %v129
    %169 = vmatprep.subr.mxu0 0.0
    %170 = vmatpush1.msra.mxu0 %v128
    %171 = vmatprep.subr.mxu0 0.0
    %172 = vmatpush2.msra.mxu0 0.0
    %173 = vmatprep.subr.mxu0 0.0
    %174 = vmatpush2.msra.mxu0 0.0
    %175 = vmatprep.subr.mxu0 0.0
    %176 = vmatpush2.msra.mxu0 0.0
    %177 = vmatprep.subr.mxu0 0.0
    %178 = vmatpush2.msra.mxu0 0.0
    %179 = vmatprep.subr.mxu0 0.0
    %180 = vmatpush2.msra.mxu0 0.0
    %181 = vmatprep.subr.mxu0 0.0
    %182 = vmatpush2.msra.mxu0 0.0
    %183 = vmatprep.subr.mxu0 0.0
    %184 = vmatpush2.msra.mxu0 0.0
    %185 = vmatprep.subr.mxu0 0.0
    %186 = vmatpush2.msra.mxu0 0.0
    %187 = vmatprep.subr.mxu0 0.0
    %188 = vmatpush2.msra.mxu0 0.0
    %189 = vmatprep.subr.mxu0 0.0
    %190 = vmatpush2.msra.mxu0 0.0
    %191 = vmatprep.subr.mxu0 0.0
    %192 = vmatpush2.msra.mxu0 0.0
    %193 = vmatprep.subr.mxu0 0.0
    %194 = vmatpush2.msra.mxu0 0.0
    %195 = vmatprep.subr.mxu0 0.0
    %196 = vmatpush2.msra.mxu0 0.0
    %197 = vmatprep.subr.mxu0 0.0
    %198 = vmatpush2.msra.mxu0 0.0
    %199 = vmatprep.subr.mxu0 0.0
    %200 = vmatpush2.msra.mxu0 0.0
    %201 = vmatprep.subr.mxu0 0.0
    %202 = vmatpush2.msra.mxu0 0.0
    %203 = vmatprep.mubr.f32.mxu0 0.0
    %204 = vmatmul.mubr.f32.gmra.mxu0 %v46
    %v205 = vpop.f32.mrf.mxu0
    %v206 = vadd.f32 %v137, %v205
    %v207 = vpop.f32.mrf.mxu0
    %208 = vmatprep.mubr.f32.mxu0 0.0
    %209 = vmatmul.mubr.f32.gmra.mxu0 %v49
    %v210 = vpop.f32.mrf.mxu0
    %v211 = vadd.f32 %v137, %v210
    %v212 = vpop.f32.mrf.mxu0
    %213 = vdwg.mxu0
    %v214 = vld [vmem:[%s6] sm:$0xff]
    %v215 = vld [vmem:[%s6 + $0x8] sm:$0xff]
    %v216 = vld [vmem:[%s6 + $0x10] sm:$0xff]
    %v217 = vld [vmem:[%s6 + $0x18] sm:$0xff]
    %v218 = vld [vmem:[%s7] sm:$0x1]
    %v220 = vlaneseq
    %v221 = vshrl.u32 %v220, 7
    %v222 = vsub.s32 0, %v221
    %v223 = vrot.slane %v218, %v222
    %225 = vmatprep.subr.mxu0 0.0
    %226 = vmatpush1.msra.mxu0 0.0
    %227 = vmatprep.subr.mxu0 0.0
    %228 = vmatpush1.msra.mxu0 0.0
    %229 = vmatprep.subr.mxu0 0.0
    %230 = vmatpush1.msra.mxu0 0.0
    %231 = vmatprep.subr.mxu0 0.0
    %232 = vmatpush1.msra.mxu0 0.0
    %233 = vmatprep.subr.mxu0 0.0
    %234 = vmatpush1.msra.mxu0 0.0
    %235 = vmatprep.subr.mxu0 0.0
    %236 = vmatpush1.msra.mxu0 0.0
    %237 = vmatprep.subr.mxu0 0.0
    %238 = vmatpush1.msra.mxu0 0.0
    %239 = vmatprep.subr.mxu0 0.0
    %240 = vmatpush1.msra.mxu0 0.0
    %241 = vmatprep.subr.mxu0 0.0
    %242 = vmatpush1.msra.mxu0 0.0
    %243 = vmatprep.subr.mxu0 0.0
    %244 = vmatpush1.msra.mxu0 0.0
    %245 = vmatprep.subr.mxu0 0.0
    %246 = vmatpush1.msra.mxu0 0.0
    %247 = vmatprep.subr.mxu0 0.0
    %248 = vmatpush1.msra.mxu0 0.0
    %249 = vmatprep.subr.mxu0 0.0
    %250 = vmatpush1.msra.mxu0 %v217
    %251 = vmatprep.subr.mxu0 0.0
    %252 = vmatpush1.msra.mxu0 %v216
    %253 = vmatprep.subr.mxu0 0.0
    %254 = vmatpush1.msra.mxu0 %v215
    %255 = vmatprep.subr.mxu0 0.0
    %256 = vmatpush1.msra.mxu0 %v214
    %257 = vmatprep.subr.mxu0 0.0
    %258 = vmatpush2.msra.mxu0 0.0
    %259 = vmatprep.subr.mxu0 0.0
    %260 = vmatpush2.msra.mxu0 0.0
    %261 = vmatprep.subr.mxu0 0.0
    %262 = vmatpush2.msra.mxu0 0.0
    %263 = vmatprep.subr.mxu0 0.0
    %264 = vmatpush2.msra.mxu0 0.0
    %265 = vmatprep.subr.mxu0 0.0
    %266 = vmatpush2.msra.mxu0 0.0
    %267 = vmatprep.subr.mxu0 0.0
    %268 = vmatpush2.msra.mxu0 0.0
    %269 = vmatprep.subr.mxu0 0.0
    %270 = vmatpush2.msra.mxu0 0.0
    %271 = vmatprep.subr.mxu0 0.0
    %272 = vmatpush2.msra.mxu0 0.0
    %273 = vmatprep.subr.mxu0 0.0
    %274 = vmatpush2.msra.mxu0 0.0
    %275 = vmatprep.subr.mxu0 0.0
    %276 = vmatpush2.msra.mxu0 0.0
    %277 = vmatprep.subr.mxu0 0.0
    %278 = vmatpush2.msra.mxu0 0.0
    %279 = vmatprep.subr.mxu0 0.0
    %280 = vmatpush2.msra.mxu0 0.0
    %281 = vmatprep.subr.mxu0 0.0
    %282 = vmatpush2.msra.mxu0 0.0
    %283 = vmatprep.subr.mxu0 0.0
    %284 = vmatpush2.msra.mxu0 0.0
    %285 = vmatprep.subr.mxu0 0.0
    %286 = vmatpush2.msra.mxu0 0.0
    %287 = vmatprep.subr.mxu0 0.0
    %288 = vmatpush2.msra.mxu0 0.0
    %289 = vmatprep.mubr.f32.mxu0 0.0
    %290 = vmatmul.mubr.f32.gmra.mxu0 %v46
    %v291 = vpop.f32.mrf.mxu0
    %v292 = vadd.f32 %v223, %v291
    %v293 = vpop.f32.mrf.mxu0
    %294 = vmatprep.mubr.f32.mxu0 0.0
    %295 = vmatmul.mubr.f32.gmra.mxu0 %v49
    %v296 = vpop.f32.mrf.mxu0
    %v297 = vadd.f32 %v223, %v296
    %v298 = vpop.f32.mrf.mxu0
    %299 = vdwg.mxu0
    %s300 = sld [smem:[#allocation2]]
    %vm301 = vcmask 64512
    %v303 = vsel %vm301, %v126, 0
    %v306 = vsel %vm301, %v206, 0
    %308 = vmatprep.subr.mxu0 0.0
    %309 = vmatpush1.xpose.msra.mxu0 0.0
    %310 = vmatprep.subr.mxu0 0.0
    %311 = vmatpush1.xpose.msra.mxu0 0.0
    %312 = vmatprep.subr.mxu0 0.0
    %313 = vmatpush1.xpose.msra.mxu0 0.0
    %314 = vmatprep.subr.mxu0 0.0
    %315 = vmatpush1.xpose.msra.mxu0 0.0
    %316 = vmatprep.subr.mxu0 0.0
    %317 = vmatpush1.xpose.msra.mxu0 0.0
    %318 = vmatprep.subr.mxu0 0.0
    %319 = vmatpush1.xpose.msra.mxu0 0.0
    %320 = vmatprep.subr.mxu0 0.0
    %321 = vmatpush1.xpose.msra.mxu0 0.0
    %322 = vmatprep.subr.mxu0 0.0
    %323 = vmatpush1.xpose.msra.mxu0 0.0
    %324 = vmatprep.subr.mxu0 0.0
    %325 = vmatpush1.xpose.msra.mxu0 0.0
    %326 = vmatprep.subr.mxu0 0.0
    %327 = vmatpush1.xpose.msra.mxu0 0.0
    %328 = vmatprep.subr.mxu0 0.0
    %329 = vmatpush1.xpose.msra.mxu0 0.0
    %330 = vmatprep.subr.mxu0 0.0
    %331 = vmatpush1.xpose.msra.mxu0 0.0
    %332 = vmatprep.subr.mxu0 0.0
    %333 = vmatpush1.xpose.msra.mxu0 0.0
    %334 = vmatprep.subr.mxu0 0.0
    %335 = vmatpush1.xpose.msra.mxu0 0.0
    %336 = vmatprep.subr.mxu0 0.0
    %337 = vmatpush1.xpose.msra.mxu0 0.0
    %338 = vmatprep.subr.mxu0 0.0
    %339 = vmatpush1.xpose.msra.mxu0 %v306
    %340 = vmatprep.subr.mxu0 0.0
    %341 = vmatpush2.xpose.msra.mxu0 0.0
    %342 = vmatprep.subr.mxu0 0.0
    %343 = vmatpush2.xpose.msra.mxu0 0.0
    %344 = vmatprep.subr.mxu0 0.0
    %345 = vmatpush2.xpose.msra.mxu0 0.0
    %346 = vmatprep.subr.mxu0 0.0
    %347 = vmatpush2.xpose.msra.mxu0 0.0
    %348 = vmatprep.subr.mxu0 0.0
    %349 = vmatpush2.xpose.msra.mxu0 0.0
    %350 = vmatprep.subr.mxu0 0.0
    %351 = vmatpush2.xpose.msra.mxu0 0.0
    %352 = vmatprep.subr.mxu0 0.0
    %353 = vmatpush2.xpose.msra.mxu0 0.0
    %354 = vmatprep.subr.mxu0 0.0
    %355 = vmatpush2.xpose.msra.mxu0 0.0
    %356 = vmatprep.subr.mxu0 0.0
    %357 = vmatpush2.xpose.msra.mxu0 0.0
    %358 = vmatprep.subr.mxu0 0.0
    %359 = vmatpush2.xpose.msra.mxu0 0.0
    %360 = vmatprep.subr.mxu0 0.0
    %361 = vmatpush2.xpose.msra.mxu0 0.0
    %362 = vmatprep.subr.mxu0 0.0
    %363 = vmatpush2.xpose.msra.mxu0 0.0
    %364 = vmatprep.subr.mxu0 0.0
    %365 = vmatpush2.xpose.msra.mxu0 0.0
    %366 = vmatprep.subr.mxu0 0.0
    %367 = vmatpush2.xpose.msra.mxu0 0.0
    %368 = vmatprep.subr.mxu0 0.0
    %369 = vmatpush2.xpose.msra.mxu0 0.0
    %370 = vmatprep.subr.mxu0 0.0
    %371 = vmatpush2.xpose.msra.mxu0 0.0
    %372 = vmatprep.mubr.f32.mxu0 0.0
    %373 = vmatmul.mubr.f32.gmra.mxu0 %v303
    %v374 = vpop.f32.mrf.mxu0
    %v375 = vadd.f32 0.0, %v374
    %v376 = vpop.f32.mrf.mxu0
    %377 = vdwg.mxu0
    %v378 = vsel %vm301, %v375, -inf
    %379 = vmax.xlane.f32.xlu0 %v378
    %v380 = vpop.xlane.xlu0 %379
    %v381 = vsub.f32 %v375, %v380
    %v382 = vmul.f32 %v381, 1.442695
    %v383 = vpow.pop %v382
    %v384 = vsel %vm301, %v383, 0.0
    %385 = vadd.xlane.f32.xlu0 %v384
    %v386 = vpop.xlane.xlu0 %385
    %v387 = vrcp.pop %v386
    %v388 = vmul.f32 %v383, %v387
    %v390 = vsel %vm301, %v388, 0
    %392 = vmatprep.subr.mxu0 0.0
    %393 = vmatpush1.msra.mxu0 0.0
    %394 = vmatprep.subr.mxu0 0.0
    %395 = vmatpush1.msra.mxu0 0.0
    %396 = vmatprep.subr.mxu0 0.0
    %397 = vmatpush1.msra.mxu0 0.0
    %398 = vmatprep.subr.mxu0 0.0
    %399 = vmatpush1.msra.mxu0 0.0
    %400 = vmatprep.subr.mxu0 0.0
    %401 = vmatpush1.msra.mxu0 0.0
    %402 = vmatprep.subr.mxu0 0.0
    %403 = vmatpush1.msra.mxu0 0.0
    %404 = vmatprep.subr.mxu0 0.0
    %405 = vmatpush1.msra.mxu0 0.0
    %406 = vmatprep.subr.mxu0 0.0
    %407 = vmatpush1.msra.mxu0 0.0
    %408 = vmatprep.subr.mxu0 0.0
    %409 = vmatpush1.msra.mxu0 0.0
    %410 = vmatprep.subr.mxu0 0.0
    %411 = vmatpush1.msra.mxu0 0.0
    %412 = vmatprep.subr.mxu0 0.0
    %413 = vmatpush1.msra.mxu0 0.0
    %414 = vmatprep.subr.mxu0 0.0
    %415 = vmatpush1.msra.mxu0 0.0
    %416 = vmatprep.subr.mxu0 0.0
    %417 = vmatpush1.msra.mxu0 0.0
    %418 = vmatprep.subr.mxu0 0.0
    %419 = vmatpush1.msra.mxu0 0.0
    %420 = vmatprep.subr.mxu0 0.0
    %421 = vmatpush1.msra.mxu0 0.0
    %422 = vmatprep.subr.mxu0 0.0
    %423 = vmatpush1.msra.mxu0 %v292
    %424 = vmatprep.subr.mxu0 0.0
    %425 = vmatpush2.msra.mxu0 0.0
    %426 = vmatprep.subr.mxu0 0.0
    %427 = vmatpush2.msra.mxu0 0.0
    %428 = vmatprep.subr.mxu0 0.0
    %429 = vmatpush2.msra.mxu0 0.0
    %430 = vmatprep.subr.mxu0 0.0
    %431 = vmatpush2.msra.mxu0 0.0
    %432 = vmatprep.subr.mxu0 0.0
    %433 = vmatpush2.msra.mxu0 0.0
    %434 = vmatprep.subr.mxu0 0.0
    %435 = vmatpush2.msra.mxu0 0.0
    %436 = vmatprep.subr.mxu0 0.0
    %437 = vmatpush2.msra.mxu0 0.0
    %438 = vmatprep.subr.mxu0 0.0
    %439 = vmatpush2.msra.mxu0 0.0
    %440 = vmatprep.subr.mxu0 0.0
    %441 = vmatpush2.msra.mxu0 0.0
    %442 = vmatprep.subr.mxu0 0.0
    %443 = vmatpush2.msra.mxu0 0.0
    %444 = vmatprep.subr.mxu0 0.0
    %445 = vmatpush2.msra.mxu0 0.0
    %446 = vmatprep.subr.mxu0 0.0
    %447 = vmatpush2.msra.mxu0 0.0
    %448 = vmatprep.subr.mxu0 0.0
    %449 = vmatpush2.msra.mxu0 0.0
    %450 = vmatprep.subr.mxu0 0.0
    %451 = vmatpush2.msra.mxu0 0.0
    %452 = vmatprep.subr.mxu0 0.0
    %453 = vmatpush2.msra.mxu0 0.0
    %454 = vmatprep.subr.mxu0 0.0
    %455 = vmatpush2.msra.mxu0 0.0
    %456 = vmatprep.mubr.f32.mxu0 0.0
    %457 = vmatmul.mubr.f32.gmra.mxu0 %v390
    %v458 = vpop.f32.mrf.mxu0
    %v459 = vadd.f32 0.0, %v458
    %v460 = vpop.f32.mrf.mxu0
    %461 = vdwg.mxu0
    %v462 = vstv %s300
    %v463 = vmul.f32 %v462, %v459
    %464 = vst.msk [vmem:[#allocation3] sm:$0xff] %vm44, %v463
    %v466 = vsel %vm301, %v127, 0
    %v469 = vsel %vm301, %v211, 0
    %471 = vmatprep.subr.mxu0 0.0
    %472 = vmatpush1.xpose.msra.mxu0 0.0
    %473 = vmatprep.subr.mxu0 0.0
    %474 = vmatpush1.xpose.msra.mxu0 0.0
    %475 = vmatprep.subr.mxu0 0.0
    %476 = vmatpush1.xpose.msra.mxu0 0.0
    %477 = vmatprep.subr.mxu0 0.0
    %478 = vmatpush1.xpose.msra.mxu0 0.0
    %479 = vmatprep.subr.mxu0 0.0
    %480 = vmatpush1.xpose.msra.mxu0 0.0
    %481 = vmatprep.subr.mxu0 0.0
    %482 = vmatpush1.xpose.msra.mxu0 0.0
    %483 = vmatprep.subr.mxu0 0.0
    %484 = vmatpush1.xpose.msra.mxu0 0.0
    %485 = vmatprep.subr.mxu0 0.0
    %486 = vmatpush1.xpose.msra.mxu0 0.0
    %487 = vmatprep.subr.mxu0 0.0
    %488 = vmatpush1.xpose.msra.mxu0 0.0
    %489 = vmatprep.subr.mxu0 0.0
    %490 = vmatpush1.xpose.msra.mxu0 0.0
    %491 = vmatprep.subr.mxu0 0.0
    %492 = vmatpush1.xpose.msra.mxu0 0.0
    %493 = vmatprep.subr.mxu0 0.0
    %494 = vmatpush1.xpose.msra.mxu0 0.0
    %495 = vmatprep.subr.mxu0 0.0
    %496 = vmatpush1.xpose.msra.mxu0 0.0
    %497 = vmatprep.subr.mxu0 0.0
    %498 = vmatpush1.xpose.msra.mxu0 0.0
    %499 = vmatprep.subr.mxu0 0.0
    %500 = vmatpush1.xpose.msra.mxu0 0.0
    %501 = vmatprep.subr.mxu0 0.0
    %502 = vmatpush1.xpose.msra.mxu0 %v469
    %503 = vmatprep.subr.mxu0 0.0
    %504 = vmatpush2.xpose.msra.mxu0 0.0
    %505 = vmatprep.subr.mxu0 0.0
    %506 = vmatpush2.xpose.msra.mxu0 0.0
    %507 = vmatprep.subr.mxu0 0.0
    %508 = vmatpush2.xpose.msra.mxu0 0.0
    %509 = vmatprep.subr.mxu0 0.0
    %510 = vmatpush2.xpose.msra.mxu0 0.0
    %511 = vmatprep.subr.mxu0 0.0
    %512 = vmatpush2.xpose.msra.mxu0 0.0
    %513 = vmatprep.subr.mxu0 0.0
    %514 = vmatpush2.xpose.msra.mxu0 0.0
    %515 = vmatprep.subr.mxu0 0.0
    %516 = vmatpush2.xpose.msra.mxu0 0.0
    %517 = vmatprep.subr.mxu0 0.0
    %518 = vmatpush2.xpose.msra.mxu0 0.0
    %519 = vmatprep.subr.mxu0 0.0
    %520 = vmatpush2.xpose.msra.mxu0 0.0
    %521 = vmatprep.subr.mxu0 0.0
    %522 = vmatpush2.xpose.msra.mxu0 0.0
    %523 = vmatprep.subr.mxu0 0.0
    %524 = vmatpush2.xpose.msra.mxu0 0.0
    %525 = vmatprep.subr.mxu0 0.0
    %526 = vmatpush2.xpose.msra.mxu0 0.0
    %527 = vmatprep.subr.mxu0 0.0
    %528 = vmatpush2.xpose.msra.mxu0 0.0
    %529 = vmatprep.subr.mxu0 0.0
    %530 = vmatpush2.xpose.msra.mxu0 0.0
    %531 = vmatprep.subr.mxu0 0.0
    %532 = vmatpush2.xpose.msra.mxu0 0.0
    %533 = vmatprep.subr.mxu0 0.0
    %534 = vmatpush2.xpose.msra.mxu0 0.0
    %535 = vmatprep.mubr.f32.mxu0 0.0
    %536 = vmatmul.mubr.f32.gmra.mxu0 %v466
    %v537 = vpop.f32.mrf.mxu0
    %v538 = vadd.f32 0.0, %v537
    %v539 = vpop.f32.mrf.mxu0
    %540 = vdwg.mxu0
    %v541 = vsel %vm301, %v538, -inf
    %542 = vmax.xlane.f32.xlu0 %v541
    %v543 = vpop.xlane.xlu0 %542
    %v544 = vsub.f32 %v538, %v543
    %v545 = vmul.f32 %v544, 1.442695
    %v546 = vpow.pop %v545
    %v547 = vsel %vm301, %v546, 0.0
    %548 = vadd.xlane.f32.xlu0 %v547
    %v549 = vpop.xlane.xlu0 %548
    %v550 = vrcp.pop %v549
    %v551 = vmul.f32 %v546, %v550
    %v553 = vsel %vm301, %v551, 0
    %555 = vmatprep.subr.mxu0 0.0
    %556 = vmatpush1.msra.mxu0 0.0
    %557 = vmatprep.subr.mxu0 0.0
    %558 = vmatpush1.msra.mxu0 0.0
    %559 = vmatprep.subr.mxu0 0.0
    %560 = vmatpush1.msra.mxu0 0.0
    %561 = vmatprep.subr.mxu0 0.0
    %562 = vmatpush1.msra.mxu0 0.0
    %563 = vmatprep.subr.mxu0 0.0
    %564 = vmatpush1.msra.mxu0 0.0
    %565 = vmatprep.subr.mxu0 0.0
    %566 = vmatpush1.msra.mxu0 0.0
    %567 = vmatprep.subr.mxu0 0.0
    %568 = vmatpush1.msra.mxu0 0.0
    %569 = vmatprep.subr.mxu0 0.0
    %570 = vmatpush1.msra.mxu0 0.0
    %571 = vmatprep.subr.mxu0 0.0
    %572 = vmatpush1.msra.mxu0 0.0
    %573 = vmatprep.subr.mxu0 0.0
    %574 = vmatpush1.msra.mxu0 0.0
    %575 = vmatprep.subr.mxu0 0.0
    %576 = vmatpush1.msra.mxu0 0.0
    %577 = vmatprep.subr.mxu0 0.0
    %578 = vmatpush1.msra.mxu0 0.0
    %579 = vmatprep.subr.mxu0 0.0
    %580 = vmatpush1.msra.mxu0 0.0
    %581 = vmatprep.subr.mxu0 0.0
    %582 = vmatpush1.msra.mxu0 0.0
    %583 = vmatprep.subr.mxu0 0.0
    %584 = vmatpush1.msra.mxu0 0.0
    %585 = vmatprep.subr.mxu0 0.0
    %586 = vmatpush1.msra.mxu0 %v297
    %587 = vmatprep.subr.mxu0 0.0
    %588 = vmatpush2.msra.mxu0 0.0
    %589 = vmatprep.subr.mxu0 0.0
    %590 = vmatpush2.msra.mxu0 0.0
    %591 = vmatprep.subr.mxu0 0.0
    %592 = vmatpush2.msra.mxu0 0.0
    %593 = vmatprep.subr.mxu0 0.0
    %594 = vmatpush2.msra.mxu0 0.0
    %595 = vmatprep.subr.mxu0 0.0
    %596 = vmatpush2.msra.mxu0 0.0
    %597 = vmatprep.subr.mxu0 0.0
    %598 = vmatpush2.msra.mxu0 0.0
    %599 = vmatprep.subr.mxu0 0.0
    %600 = vmatpush2.msra.mxu0 0.0
    %601 = vmatprep.subr.mxu0 0.0
    %602 = vmatpush2.msra.mxu0 0.0
    %603 = vmatprep.subr.mxu0 0.0
    %604 = vmatpush2.msra.mxu0 0.0
    %605 = vmatprep.subr.mxu0 0.0
    %606 = vmatpush2.msra.mxu0 0.0
    %607 = vmatprep.subr.mxu0 0.0
    %608 = vmatpush2.msra.mxu0 0.0
    %609 = vmatprep.subr.mxu0 0.0
    %610 = vmatpush2.msra.mxu0 0.0
    %611 = vmatprep.subr.mxu0 0.0
    %612 = vmatpush2.msra.mxu0 0.0
    %613 = vmatprep.subr.mxu0 0.0
    %614 = vmatpush2.msra.mxu0 0.0
    %615 = vmatprep.subr.mxu0 0.0
    %616 = vmatpush2.msra.mxu0 0.0
    %617 = vmatprep.subr.mxu0 0.0
    %618 = vmatpush2.msra.mxu0 0.0
    %619 = vmatprep.mubr.f32.mxu0 0.0
    %620 = vmatmul.mubr.f32.gmra.mxu0 %v553
    %v621 = vpop.f32.mrf.mxu0
    %v622 = vadd.f32 0.0, %v621
    %v623 = vpop.f32.mrf.mxu0
    %624 = vdwg.mxu0
    %v625 = vmul.f32 %v462, %v622
    %626 = vst.msk [vmem:[#allocation3 + $0x8] sm:$0xff] %vm44, %v625
    // Predicated region
    $region34: #{tpu_custom_call.1} parent=1 // pred_check
      _
    $region35: #{tpu_custom_call.1} parent=1 // pred_check_branch
      %628 = sbr.rel (0) target = $region37
    $region36: #{tpu_custom_call.1} parent=1 // pred_region
      %s630 = ssub.s32 256, 256
      %631 = vsyncadd [#allocation4], %s630
      %s632 = sshll.u32 [#allocation3], 4
      %s633 = int_to_ptr.vmem [resolvable:$true] %s632
      %638 = dma.vmem_to_hbm [thread:$0]  %s633, 256, %s8, [#allocation4], 128, 128, 8
    $region37: #{tpu_custom_call.1} parent=1 // pred_fallthru
      _
    // Predicated region
    $region38: #{tpu_custom_call.1} parent=1 // pred_check
      _
    $region39: #{tpu_custom_call.1} parent=1 // pred_check_branch
      %640 = sbr.rel (0) target = $region41
    $region40: #{tpu_custom_call.1} parent=1 // pred_region
      %641 = dma.done [#allocation4], 256
    $region41: #{tpu_custom_call.1} parent=1 // pred_fallthru
      _
    %642 = vsyncpa [#allocation4], 1

</llo_original>
